<compile_context>
chip_gen: v7x
topology: tpu7x:2x2x1
jax: 0.10.0
libtpu: 0.0.40
codegen_flags: <defaults>
</compile_context>

<pallas_src>
import functools

import jax
import jax.numpy as jnp
from jax.experimental import pallas as pl
from jax.experimental.pallas import tpu as pltpu


def _ce_kernel(x_ref, lbl_ref, o_ref, *, n_valid):
    """One batch tile: partial sum of per-sample CE losses -> lane-dense block."""
    i = pl.program_id(0)

    x = x_ref[...].astype(jnp.float32)          # (TN, C) upcast in-kernel
    lbl = lbl_ref[...]                          # (TN, 1) int32
    tn, c = x.shape

    # Numerically stable logsumexp along the class axis.
    m = jnp.max(x, axis=-1, keepdims=True)                               # (TN, 1)
    xm = x - m                                                           # (TN, C)
    lse = jnp.log(jnp.sum(jnp.exp(xm), axis=-1, keepdims=True))          # (TN, 1)

    # Gather pred[i, label_i] via a vectorized mask on the already-shifted
    # tile (no dense one-hot input; reuses xm instead of keeping x live).
    cls = jax.lax.broadcasted_iota(jnp.int32, (tn, c), 1)                # (TN, C)
    picked_shifted = jnp.sum(jnp.where(cls == lbl, xm, 0.0),
                             axis=-1, keepdims=True)                     # (TN, 1)

    # per-sample CE = logsumexp(x) - x[label] = lse - (x[label] - m)
    per_sample = lse - picked_shifted                                    # (TN, 1)

    # Mask rows past the true batch size (covers both the ragged last logit
    # block's garbage rows and label padding).  Select -> NaN cannot leak.
    row = i * tn + jax.lax.broadcasted_iota(jnp.int32, (tn, 1), 0)
    per_sample = jnp.where(row < n_valid, per_sample, 0.0)

    # Pre-scale by 1/1024 (exact) so the wrapper can do one dense sum over the
    # broadcasted (8, 128) block without a strided [:, 0, 0] gather.
    partial = jnp.sum(per_sample) * jnp.float32(1.0 / 1024.0)
    o_ref[...] = jnp.full((1, 8, 128), partial, dtype=jnp.float32)


def _round_up(x, m):
    return ((x + m - 1) // m) * m


def _pick_tile_n(n, c):
    # f32 temporaries dominate the per-step VMEM working set, so budget rows
    # by tile_n * C * 4 bytes <= 6 MiB:
    #   2 x tile input (double-buffered, <= f32)  +  ~4 x tile f32 temporaries
    #   ~= 36 MiB  -> fits v7x's 64 MiB VMEM with headroom (v5e/v6e trivially).
    cap_rows = max(8, (6 * 1024 * 1024) // max(c * 4, 1))
    tn = max(8, (min(cap_rows, 2048) // 8) * 8)
    # Keep at least 2 grid tiles so v7x's two TensorCores both get work.
    if n > 8:
        tn = min(tn, max(8, _round_up((n + 1) // 2, 8)))
    return min(tn, _round_up(n, 8))


def ce_loss(pred, label):
    """pred: [N, C] logits, label: [N] int class indices -> scalar mean CE loss."""
    assert pred.ndim == 2 and label.ndim == 1 and pred.shape[0] == label.shape[0]
    n, c = pred.shape

    tile_n = _pick_tile_n(n, c)
    n_tiles = pl.cdiv(n, tile_n)
    n_pad = n_tiles * tile_n

    # Only the tiny int32 label vector is padded; the [N, C] logits are passed
    # through unpadded/uncast -- the ragged last block is masked in-kernel.
    label_i32 = label.astype(jnp.int32)
    if n_pad != n:
        label_i32 = jnp.pad(label_i32, (0, n_pad - n))
    label2d = label_i32.reshape(n_pad, 1)

    grid_spec = pltpu.PrefetchScalarGridSpec(
        num_scalar_prefetch=0,
        grid=(n_tiles,),
        in_specs=[
            pl.BlockSpec((tile_n, c), lambda i: (i, 0)),   # logits tile (any dtype)
            pl.BlockSpec((tile_n, 1), lambda i: (i, 0)),   # int32 labels tile
        ],
        out_specs=pl.BlockSpec((1, 8, 128), lambda i: (i, 0, 0)),
    )

    partials = pl.pallas_call(
        functools.partial(_ce_kernel, n_valid=n),
        out_shape=jax.ShapeDtypeStruct((n_tiles, 8, 128), jnp.float32),
        grid_spec=grid_spec,
        compiler_params=pltpu.CompilerParams(
            dimension_semantics=("parallel",),          # batch tiles independent
            vmem_limit_bytes=48 * 1024 * 1024,          # <64 MiB physical on v7x
        ),
    )(pred, label2d)

    # Every element of a tile's block holds partial/1024 -> one dense sum,
    # then divide by the TRUE batch size (padded/ragged rows were zeroed).
    return jnp.sum(partials) / n


def _reference_ce(pred, label):
    logp = jax.nn.log_softmax(pred.astype(jnp.float32), axis=-1)
    return -jnp.mean(logp[jnp.arange(pred.shape[0]), label])


if __name__ == "__main__":
    key = jax.random.PRNGKey(0)

    # Case 1: small aligned shapes.
    k1, k2, k3, k4 = jax.random.split(key, 4)
    N1, C1 = 8, 32
    pred1 = jax.random.normal(k1, (N1, C1), dtype=jnp.float32)
    label1 = jax.random.randint(k2, (N1,), 0, C1, dtype=jnp.int32)
    loss1 = ce_loss(pred1, label1)
    jax.block_until_ready(loss1)
    ref1 = _reference_ce(pred1, label1)
    assert jnp.allclose(loss1, ref1, rtol=1e-5, atol=1e-5), (loss1, ref1)

    # Case 2: ragged batch (N not a multiple of the tile) -> exercises the
    # no-logit-pad path with the in-kernel row mask.
    N2, C2 = 13, 100
    pred2 = jax.random.normal(k3, (N2, C2), dtype=jnp.float32)
    label2 = jax.random.randint(k4, (N2,), 0, C2, dtype=jnp.int32)
    loss2 = ce_loss(pred2, label2)
    jax.block_until_ready(loss2)
    ref2 = _reference_ce(pred2, label2)
    assert jnp.allclose(loss2, ref2, rtol=1e-5, atol=1e-5), (loss2, ref2)

    print("KERNEL_OK")
</pallas_src>

<mosaic_0001>
module attributes {stable_mosaic.version = 11 : i64} {
  func.func @_ce_kernel(%arg0: i32, %arg1: memref<8x32xf32, #tpu.memory_space<vmem>>, %arg2: memref<8x1xi32, #tpu.memory_space<vmem>>, %arg3: memref<1x8x128xf32, #tpu.memory_space<vmem>>) attributes {dimension_semantics = [#tpu.dimension_semantics<parallel>], iteration_bounds = array<i64: 1>, scalar_prefetch = 0 : i64, scratch_operands = 0 : i64, tpu.core_type = #tpu.core_type<tc>, window_params = [{transform_indices = @transform_0, window_bounds = array<i64: 8, 32>}, {transform_indices = @transform_1, window_bounds = array<i64: 8, 1>}, {transform_indices = @transform_2, window_bounds = array<i64: 1, 8, 128>}]} {
    %c0 = arith.constant 0 : index
    %c0_0 = arith.constant 0 : index
    %0 = vector.load %arg1[%c0, %c0_0] : memref<8x32xf32, #tpu.memory_space<vmem>>, vector<8x32xf32>
    %c0_1 = arith.constant 0 : index
    %c0_2 = arith.constant 0 : index
    %1 = vector.load %arg2[%c0_1, %c0_2] : memref<8x1xi32, #tpu.memory_space<vmem>>, vector<8x1xi32>
    %cst = arith.constant dense<0xFF800000> : vector<8xf32>
    %2 = vector.multi_reduction <maximumf>, %0, %cst [1] : vector<8x32xf32> to vector<8xf32>
    %3 = vector.shape_cast %2 : vector<8xf32> to vector<8x1xf32>
    %4 = vector.broadcast %3 : vector<8x1xf32> to vector<8x32xf32>
    %5 = arith.subf %0, %4 : vector<8x32xf32>
    %6 = math.exp %5 : vector<8x32xf32>
    %cst_3 = arith.constant dense<0.000000e+00> : vector<8xf32>
    %7 = vector.multi_reduction <add>, %6, %cst_3 [1] : vector<8x32xf32> to vector<8xf32>
    %8 = vector.shape_cast %7 : vector<8xf32> to vector<8x1xf32>
    %9 = math.log %8 : vector<8x1xf32>
    %10 = tpu.iota {dimensions = array<i32: 1>} : vector<8x32xi32>
    %11 = vector.broadcast %1 : vector<8x1xi32> to vector<8x32xi32>
    %12 = arith.cmpi eq, %10, %11 : vector<8x32xi32>
    %cst_4 = arith.constant 0.000000e+00 : f32
    %13 = vector.broadcast %cst_4 : f32 to vector<8x32xf32>
    %14 = arith.select %12, %5, %13 : vector<8x32xi1>, vector<8x32xf32>
    %cst_5 = arith.constant dense<0.000000e+00> : vector<8xf32>
    %15 = vector.multi_reduction <add>, %14, %cst_5 [1] : vector<8x32xf32> to vector<8xf32>
    %16 = vector.shape_cast %15 : vector<8xf32> to vector<8x1xf32>
    %17 = arith.subf %9, %16 : vector<8x1xf32>
    %c8_i32 = arith.constant 8 : i32
    %18 = arith.muli %arg0, %c8_i32 : i32
    %19 = tpu.iota {dimensions = array<i32: 0>} : vector<8x1xi32>
    %20 = vector.broadcast %18 : i32 to vector<8x1xi32>
    %21 = arith.addi %20, %19 : vector<8x1xi32>
    %c8_i32_6 = arith.constant 8 : i32
    %22 = vector.broadcast %c8_i32_6 : i32 to vector<8x1xi32>
    %23 = arith.cmpi slt, %21, %22 : vector<8x1xi32>
    %cst_7 = arith.constant 0.000000e+00 : f32
    %24 = vector.broadcast %cst_7 : f32 to vector<8x1xf32>
    %25 = arith.select %23, %17, %24 : vector<8x1xi1>, vector<8x1xf32>
    %26 = vector.shape_cast %25 : vector<8x1xf32> to vector<1x8x1xf32>
    %cst_8 = arith.constant dense<0.000000e+00> : vector<1xf32>
    %27 = vector.multi_reduction <add>, %26, %cst_8 [1, 2] : vector<1x8x1xf32> to vector<1xf32>
    %28 = vector.shape_cast %27 : vector<1xf32> to vector<1x1x1xf32>
    %29 = vector.extract %28[0, 0, 0] : f32 from vector<1x1x1xf32>
    %cst_9 = arith.constant 9.765625E-4 : f32
    %30 = arith.mulf %29, %cst_9 : f32
    %31 = vector.broadcast %30 : f32 to vector<1x8x128xf32>
    %c0_10 = arith.constant 0 : index
    %c0_11 = arith.constant 0 : index
    %c0_12 = arith.constant 0 : index
    %32 = vector.load %arg3[%c0_10, %c0_11, %c0_12] : memref<1x8x128xf32, #tpu.memory_space<vmem>>, vector<1x8x128xf32>
    tpu.vector_store %arg3[%c0_10, %c0_11, %c0_12], %31 {strides = array<i32>} : memref<1x8x128xf32, #tpu.memory_space<vmem>>, vector<1x8x128xf32>,
    return
  }
  func.func @transform_0(%arg0: i32) -> (i32, i32) {
    %c0_i32 = arith.constant 0 : i32
    %c0_i32_0 = arith.constant 0 : i32
    return %arg0, %c0_i32 : i32, i32
  }
  func.func @transform_1(%arg0: i32) -> (i32, i32) {
    %c0_i32 = arith.constant 0 : i32
    %c0_i32_0 = arith.constant 0 : i32
    return %arg0, %c0_i32 : i32, i32
  }
  func.func @transform_2(%arg0: i32) -> (i32, i32, i32) {
    %c0_i32 = arith.constant 0 : i32
    %c0_i32_0 = arith.constant 0 : i32
    %c0_i32_1 = arith.constant 0 : i32
    return %arg0, %c0_i32, %c0_i32_0 : i32, i32, i32
  }
}

</mosaic_0001>

<llo_original>
// kernel: tpu_custom_call.1
$region0: #{tpu_custom_call.1}
  #allocation0 [shape = 'u32[]', space=smem, size = 0x4, offset = 0x4, fixed_abs, tag = 'smem constant byte address 0x4 - core index']
  #allocation1 [shape = 'u32[144,128]{1,0:T(1,128)}', space=vmem, size = 0x12000, scoped, tag = 'internal scratch']
  %s0 = inlined_call_operand.vmem [shape: f32[8,32], index: 0, kind: input, shape index: {}]
  %s1 = inlined_call_operand.vmem [shape: s32[8,1], index: 1, kind: input, shape index: {}]
  %s2 = inlined_call_operand.hbm [shape: f32[1,8,128], index: 2, kind: output, shape index: {}]
  %s3 = sld [smem:[#allocation0]]
  $region18: #{tpu_custom_call.1} parent=0
    _
  %s5 = ssub.s32 1, %s3
  %s6 = scalar_select 0, %s5, %s3
  $region1: #{tpu_custom_call.1} parent=0
    #allocation2 [shape = 'u8[4096]{0}', space=vmem, size = 0x1000, scoped, tag = 'output window, operand 0, single buffered']
    #allocation3 [shape = 's32[1]{0}', space=sflag, size = 0x4, scoped, tag = 'scoped memory for tpu_custom_call.1']
    %7 = vsyncpa [#allocation3], 0
    // Predicated region
    $region2: #{tpu_custom_call.1} parent=1 // pred_check
      _
    $region3: #{tpu_custom_call.1} parent=1 // pred_check_branch
      %9 = sbr.rel (0) target = $region5
    $region4: #{tpu_custom_call.1} parent=1 // pred_region
      _
    $region5: #{tpu_custom_call.1} parent=1 // pred_fallthru
      _
    // Predicated region
    $region6: #{tpu_custom_call.1} parent=1 // pred_check
      _
    $region7: #{tpu_custom_call.1} parent=1 // pred_check_branch
      %11 = sbr.rel (0) target = $region9
    $region8: #{tpu_custom_call.1} parent=1 // pred_region
      _
    $region9: #{tpu_custom_call.1} parent=1 // pred_fallthru
      _
    %v12 = vld [vmem:[%s0] sm:$0xff]
    %v13 = vld [vmem:[%s1] sm:$0xff]
    %vm14 = vcmask 261120
    %v15 = vsel %vm14, %v12, -inf
    %16 = vmax.xlane.f32.xlu0 %v15
    %v17 = vpop.xlane.xlu0 %16
    %v18 = vsub.f32 %v12, %v17
    %v19 = vmul.f32 %v18, 1.442695
    %v20 = vpow.pop %v19
    %v21 = vsel %vm14, %v20, 0.0
    %22 = vadd.xlane.f32.xlu0 %v21
    %v23 = vpop.xlane.xlu0 %22
    %v24 = vlog2.pop %v23
    %v25 = vmul.f32 %v24, 0.6931472
    %v26 = vlaneseq
    %v27 = vand.u32 %v26, 127
    %28 = vset.pattern.permute.xlu0 0
    %29 = vperm.xlu0 %28, %v13
    %v30 = vpop.permute.xlu0 %29
    %vm31 = vcmp.eq.s32.totalorder %v27, %v30
    %v32 = vsel %vm31, %v18, 0.0
    %v33 = vsel %vm14, %v32, 0.0
    %34 = vadd.xlane.f32.xlu0 %v33
    %v35 = vpop.xlane.xlu0 %34
    %v36 = vsub.f32 %v25, %v35
    %s37 = smul.u32 0, 8
    %v38 = vlaneseq
    %v39 = vshrl.u32 %v38, 7
    %v40 = vstv %s37
    %v41 = vadd.s32 %v40, %v39
    %vm42 = vcmp.lt.s32.totalorder %v41, 8
    %v43 = vsel %vm42, %v36, 0.0
    %vm44 = vcmask 7168
    %v45 = vsel %vm44, %v43, 0.0
    %46 = vadd.xlane.f32.xlu0 %v45
    %v47 = vpop.xlane.xlu0 %46
    %v48 = vrot.slane %v47, 4
    %v49 = vadd.f32 %v47, %v48
    %v50 = vrot.slane %v49, 2
    %v51 = vadd.f32 %v49, %v50
    %v52 = vrot.slane %v51, 1
    %v53 = vadd.f32 %v51, %v52
    %s54 = vtos %v53
    %s55 = smul.f32 %s54, 0.0009765625
    %v56 = vstv %s55
    %57 = vst [vmem:[#allocation2] sm:$0xff] %v56
    // Predicated region
    $region10: #{tpu_custom_call.1} parent=1 // pred_check
      _
    $region11: #{tpu_custom_call.1} parent=1 // pred_check_branch
      %59 = sbr.rel (0) target = $region13
    $region12: #{tpu_custom_call.1} parent=1 // pred_region
      %s61 = ssub.s32 128, 128
      %62 = vsyncadd [#allocation3], %s61
      %s64 = sshll.u32 [#allocation2], 4
      %s65 = int_to_ptr.vmem [resolvable:$true] %s64
      %67 = dma.vmem_to_hbm [thread:$0]  %s65, 128, %s2, [#allocation3]
    $region13: #{tpu_custom_call.1} parent=1 // pred_fallthru
      _
    // Predicated region
    $region14: #{tpu_custom_call.1} parent=1 // pred_check
      _
    $region15: #{tpu_custom_call.1} parent=1 // pred_check_branch
      %69 = sbr.rel (0) target = $region17
    $region16: #{tpu_custom_call.1} parent=1 // pred_region
      %70 = dma.done [#allocation3], 128
    $region17: #{tpu_custom_call.1} parent=1 // pred_fallthru
      _
    %71 = vsyncpa [#allocation3], 1

</llo_original>
